<compile_context>
chip_gen: v6e
topology: v6e:2x2x1
jax: 0.10.0
libtpu: 0.0.40
codegen_flags: <defaults>
</compile_context>

<pallas_src>
import functools

import numpy as np
import jax
import jax.numpy as jnp
from jax.experimental import pallas as pl
from jax.experimental.pallas import tpu as pltpu


def _round_up(x, m):
    return ((x + m - 1) // m) * m


def _sum_all(x):
    """Staged full reduction of a rank-3 value -> (1, 1, 1): minor axes first."""
    s = jnp.sum(x, axis=2, keepdims=True)
    s = jnp.sum(s, axis=1, keepdims=True)
    return jnp.sum(s, axis=0, keepdims=True)


def _set_criterion_kernel(logits_ref,   # (Bc, Q, C+1) model dtype (f32 / bf16)
                          tgt_cls_ref,  # (Bc, Q, 1)  int32 target class per query
                          cw_ref,       # (1, 1, C+1) f32   class weights (empty_weight)
                          tgt_len_ref,  # (Bc, 1, 1)  f32   number of GT boxes per image
                          bsrc_ref,     # (Bc, N, 4)  f32   matched predicted boxes (cxcywh)
                          btgt_ref,     # (Bc, N, 4)  f32   matched target boxes (cxcywh)
                          bmask_ref,    # (Bc, N, 1)  f32   1 for real matched pairs
                          out_ref,      # (1, 8, 128) f32   packed partial sums
                          *, num_classes: int):
    # CE / lse math in f32 regardless of the ingest dtype (bf16-friendly).
    logits = logits_ref[...].astype(jnp.float32)          # (Bc, Q, C1)
    tgt = tgt_cls_ref[...]                                 # (Bc, Q, 1) int32
    cw = cw_ref[...]                                       # (1, 1, C1) f32

    bc, q, c1 = logits.shape
    cls_iota = jax.lax.broadcasted_iota(jnp.int32, (bc, q, c1), 2)

    # ---------------- loss_labels: weighted cross-entropy partial sums ------
    m = jnp.max(logits, axis=-1, keepdims=True)
    lse = m + jnp.log(jnp.sum(jnp.exp(logits - m), axis=-1, keepdims=True))
    onehot = (cls_iota == tgt).astype(jnp.float32)                     # (Bc, Q, C1)
    logit_t = jnp.sum(logits * onehot, axis=-1, keepdims=True)         # (Bc, Q, 1)
    w_t = jnp.sum(cw * onehot, axis=-1, keepdims=True)                 # (Bc, Q, 1)
    nll = lse - logit_t
    ce_num = _sum_all(w_t * nll)                                       # (1, 1, 1)
    ce_den = _sum_all(w_t)                                             # (1, 1, 1)

    # ---------------- loss_cardinality (static lane slices, no masks) -------
    noobj = logits[:, :, num_classes:num_classes + 1]                  # (Bc, Q, 1)
    max_real = jnp.max(logits[:, :, :num_classes], axis=-1, keepdims=True)
    # argmax(logits) != no_object ; >= matches torch argmax tie-break (first index).
    nonempty = (max_real >= noobj).astype(jnp.float32)                 # (Bc, Q, 1)
    card_pred = jnp.sum(nonempty, axis=1, keepdims=True)               # (Bc, 1, 1)
    card_sum = _sum_all(jnp.abs(card_pred - tgt_len_ref[...]))         # (1, 1, 1)

    # ---------------- loss_boxes: L1 + GIoU partial sums --------------------
    src = bsrc_ref[...]                                                # (Bc, N, 4)
    tgb = btgt_ref[...]                                                # (Bc, N, 4)
    bmask = bmask_ref[...]                                             # (Bc, N, 1)

    l1_sum = _sum_all(jnp.abs(src - tgb) * bmask)

    def cxcywh_to_xyxy(bx):
        cx, cy, w, h = bx[:, :, 0:1], bx[:, :, 1:2], bx[:, :, 2:3], bx[:, :, 3:4]
        return cx - 0.5 * w, cy - 0.5 * h, cx + 0.5 * w, cy + 0.5 * h

    sx0, sy0, sx1, sy1 = cxcywh_to_xyxy(src)
    tx0, ty0, tx1, ty1 = cxcywh_to_xyxy(tgb)
    area_s = (sx1 - sx0) * (sy1 - sy0)
    area_t = (tx1 - tx0) * (ty1 - ty0)
    iw = jnp.maximum(jnp.minimum(sx1, tx1) - jnp.maximum(sx0, tx0), 0.0)
    ih = jnp.maximum(jnp.minimum(sy1, ty1) - jnp.maximum(sy0, ty0), 0.0)
    inter = iw * ih
    union = area_s + area_t - inter
    iou = inter / union          # padded pairs carry dummy non-degenerate boxes -> finite
    ew = jnp.maximum(sx1, tx1) - jnp.minimum(sx0, tx0)
    eh = jnp.maximum(sy1, ty1) - jnp.minimum(sy0, ty0)
    area_e = ew * eh
    giou = iou - (area_e - union) / area_e
    giou_sum = _sum_all((1.0 - giou) * bmask)

    # ---------------- pack partial sums into one lane-dense (1, 8, 128) -----
    row = jax.lax.broadcasted_iota(jnp.int32, (1, 8, 128), 1)
    lane = jax.lax.broadcasted_iota(jnp.int32, (1, 8, 128), 2)
    r0 = row == 0
    packed = (jnp.where(r0 & (lane == 0), ce_num, 0.0)
              + jnp.where(r0 & (lane == 1), ce_den, 0.0)
              + jnp.where(r0 & (lane == 2), card_sum, 0.0)
              + jnp.where(r0 & (lane == 3), l1_sum, 0.0)
              + jnp.where(r0 & (lane == 4), giou_sum, 0.0))
    out_ref[...] = packed


def _fused_criterion_call(logits, tgt_cls, cw, tgt_len, bsrc, btgt, bmask,
                          *, num_classes, grid_chunks=1):
    B, Q, C1 = logits.shape
    N = bsrc.shape[1]
    G = grid_chunks if (grid_chunks > 0 and B % grid_chunks == 0) else 1
    Bc = B // G
    kernel = functools.partial(_set_criterion_kernel, num_classes=num_classes)

    # Only raise the scoped-VMEM limit when a whole-batch block would exceed
    # the small defaults (v5e 16 MiB / v6e-v7x 32 MiB); inputs are double-buffered.
    per_step_bytes = (np.dtype(logits.dtype).itemsize * Q * C1 + 4 * Q
                      + 4 * C1 + 4 + 4 * N * 4 * 2 + 4 * N) * Bc
    need = 2 * per_step_bytes + 8 * 128 * 4 + (2 << 20)
    cp_kwargs = dict(dimension_semantics=("parallel",))
    if need > (16 << 20):
        cp_kwargs["vmem_limit_bytes"] = int(min(2 * need, 100 << 20))

    return pl.pallas_call(
        kernel,
        out_shape=jax.ShapeDtypeStruct((G, 8, 128), jnp.float32),
        grid=(G,),
        in_specs=[
            pl.BlockSpec((Bc, Q, C1), lambda g: (g, 0, 0)),
            pl.BlockSpec((Bc, Q, 1), lambda g: (g, 0, 0)),
            pl.BlockSpec((1, 1, C1), lambda g: (0, 0, 0)),   # resident class weights
            pl.BlockSpec((Bc, 1, 1), lambda g: (g, 0, 0)),
            pl.BlockSpec((Bc, N, 4), lambda g: (g, 0, 0)),
            pl.BlockSpec((Bc, N, 4), lambda g: (g, 0, 0)),
            pl.BlockSpec((Bc, N, 1), lambda g: (g, 0, 0)),
        ],
        out_specs=pl.BlockSpec((1, 8, 128), lambda g: (g, 0, 0)),
        compiler_params=pltpu.CompilerParams(**cp_kwargs),
    )(logits, tgt_cls, cw, tgt_len, bsrc, btgt, bmask)


class SetCriterion:
    """Pallas port of DETR SetCriterion forward (labels / cardinality / boxes)."""

    def __init__(self, num_classes, matcher=None, weight_dict=None, eos_coef=0.1,
                 losses=('labels', 'cardinality', 'boxes'), grid_chunks=1):
        self.num_classes = num_classes
        self.matcher = matcher       # TODO(synk): Hungarian matcher not ported; pass indices explicitly.
        self.weight_dict = weight_dict or {}
        self.eos_coef = eos_coef
        self.losses = list(losses)
        # grid_chunks=2 on v7x lets both TensorCores take half the batch.
        self.grid_chunks = grid_chunks
        ew = np.ones((1, 1, num_classes + 1), np.float32)
        ew[0, 0, -1] = eos_coef
        self.empty_weight = jnp.asarray(ew)   # uploaded once, device-resident

    def __call__(self, outputs, targets, indices):
        pred_logits = outputs['pred_logits']   # device array (B, Q, C+1), f32 or bf16
        pred_boxes = outputs['pred_boxes']     # device array (B, Q, 4)
        B, Q, C1 = pred_logits.shape
        assert C1 == self.num_classes + 1

        # ---- tiny host-side staging: only matching artifacts (a few KB) ----
        n_per = [len(np.asarray(src)) for src, _ in indices]
        Nmax = max(8, _round_up(max(n_per + [1]), 8))

        tgt_cls = np.full((B, Q, 1), self.num_classes, np.int32)
        src_idx = np.zeros((B, Nmax), np.int32)
        tgt_box = np.zeros((B, Nmax, 4), np.float32)
        tgt_box[..., 0:2] = 0.5                  # dummy boxes keep padded GIoU lanes finite
        tgt_box[..., 2:4] = 1.0
        bmask = np.zeros((B, Nmax, 1), np.float32)
        tgt_len = np.zeros((B, 1, 1), np.float32)

        for b, (src, tgt) in enumerate(indices):
            src = np.asarray(src, np.int64)
            tgt = np.asarray(tgt, np.int64)
            labels_b = np.asarray(targets[b]['labels'], np.int64)
            tgt_len[b, 0, 0] = float(len(labels_b))
            n = len(src)
            if n == 0:
                continue
            tgt_cls[b, src, 0] = labels_b[tgt]
            src_idx[b, :n] = src
            tgt_box[b, :n] = np.asarray(targets[b]['boxes'], np.float32)[tgt]
            bmask[b, :n, 0] = 1.0

        num_boxes = max(float(tgt_len.sum()), 1.0)
        # TODO(synk): distributed all_reduce of num_boxes across data-parallel workers not ported.

        # ---- device-side gather of matched predicted boxes (no D2H sync) ----
        src_idx_dev = jnp.asarray(src_idx)                                   # (B, Nmax)
        gather_idx = jnp.broadcast_to(src_idx_dev[..., None], (B, Nmax, 4))
        src_boxes = jnp.take_along_axis(pred_boxes.astype(jnp.float32),
                                        gather_idx, axis=1)                 # (B, Nmax, 4)

        # ---- single fused Pallas kernel (whole batch / per-core chunk) ----
        out = _fused_criterion_call(
            pred_logits, jnp.asarray(tgt_cls), self.empty_weight,
            jnp.asarray(tgt_len), src_boxes, jnp.asarray(tgt_box),
            jnp.asarray(bmask),
            num_classes=self.num_classes, grid_chunks=self.grid_chunks)

        tot = jnp.sum(out[:, 0, :], axis=0)      # (128,) summed over grid chunks
        losses = {}
        if 'labels' in self.losses:
            losses['loss_ce'] = tot[0] / tot[1]
            losses['class_error'] = jnp.asarray(89.0, jnp.float32)   # hard-coded in the reference module
        if 'cardinality' in self.losses:
            losses['cardinality_error'] = tot[2] / B
        if 'boxes' in self.losses:
            losses['loss_bbox'] = tot[3] / num_boxes
            losses['loss_giou'] = tot[4] / num_boxes
        # TODO(synk): 'masks', 'poses' losses and the aux_outputs loop are not ported.
        return losses


# --------------------------- pure numpy reference ---------------------------
def _reference_losses(pred_logits, pred_boxes, targets, indices, num_classes, eos_coef):
    logits = np.asarray(pred_logits, np.float64)
    boxes_p = np.asarray(pred_boxes, np.float64)
    B, Q, C1 = logits.shape
    empty_weight = np.ones(C1, np.float64)
    empty_weight[-1] = eos_coef

    target_classes = np.full((B, Q), num_classes, np.int64)
    for b, (src, tgt) in enumerate(indices):
        target_classes[b, np.asarray(src)] = np.asarray(targets[b]['labels'])[np.asarray(tgt)]

    m = logits.max(-1, keepdims=True)
    lse = m[..., 0] + np.log(np.exp(logits - m).sum(-1))
    xt = np.take_along_axis(logits, target_classes[..., None], axis=-1)[..., 0]
    nll = lse - xt
    w = empty_weight[target_classes]
    loss_ce = (w * nll).sum() / w.sum()

    card_pred = (logits.argmax(-1) != C1 - 1).sum(1)
    tgt_len = np.array([len(np.asarray(t['labels'])) for t in targets], np.float64)
    card_err = np.abs(card_pred - tgt_len).mean()

    num_boxes = max(float(tgt_len.sum()), 1.0)
    sb = np.concatenate([boxes_p[b, np.asarray(src)] for b, (src, _) in enumerate(indices)], 0)
    tb = np.concatenate([np.asarray(targets[b]['boxes'], np.float64)[np.asarray(tgt)]
                         for b, (_, tgt) in enumerate(indices)], 0)
    loss_bbox = np.abs(sb - tb).sum() / num_boxes

    def xyxy(bx):
        cx, cy, w_, h_ = bx[:, 0], bx[:, 1], bx[:, 2], bx[:, 3]
        return np.stack([cx - 0.5 * w_, cy - 0.5 * h_, cx + 0.5 * w_, cy + 0.5 * h_], 1)

    s, t = xyxy(sb), xyxy(tb)
    area_s = (s[:, 2] - s[:, 0]) * (s[:, 3] - s[:, 1])
    area_t = (t[:, 2] - t[:, 0]) * (t[:, 3] - t[:, 1])
    inter = (np.clip(np.minimum(s[:, 2], t[:, 2]) - np.maximum(s[:, 0], t[:, 0]), 0, None)
             * np.clip(np.minimum(s[:, 3], t[:, 3]) - np.maximum(s[:, 1], t[:, 1]), 0, None))
    union = area_s + area_t - inter
    iou = inter / union
    area_e = (np.clip(np.maximum(s[:, 2], t[:, 2]) - np.minimum(s[:, 0], t[:, 0]), 0, None)
              * np.clip(np.maximum(s[:, 3], t[:, 3]) - np.minimum(s[:, 1], t[:, 1]), 0, None))
    giou = iou - (area_e - union) / area_e
    loss_giou = (1.0 - giou).sum() / num_boxes

    return {'loss_ce': loss_ce, 'cardinality_error': card_err,
            'loss_bbox': loss_bbox, 'loss_giou': loss_giou}


if __name__ == "__main__":
    key = jax.random.PRNGKey(0)
    k1, k2 = jax.random.split(key)

    B, Q, num_classes = 2, 16, 8
    eos_coef = 0.1

    pred_logits = jax.random.normal(k1, (B, Q, num_classes + 1), jnp.float32)
    pred_boxes = jax.nn.sigmoid(jax.random.normal(k2, (B, Q, 4), jnp.float32))

    targets = [
        {'labels': np.array([1, 4, 7], np.int32),
         'boxes': np.array([[0.30, 0.40, 0.20, 0.25],
                            [0.60, 0.55, 0.30, 0.20],
                            [0.45, 0.65, 0.15, 0.30]], np.float32)},
        {'labels': np.array([2, 5], np.int32),
         'boxes': np.array([[0.50, 0.50, 0.40, 0.35],
                            [0.25, 0.70, 0.20, 0.15]], np.float32)},
    ]
    # Precomputed Hungarian matching: (src query idx, target idx) per image.
    indices = [(np.array([2, 5, 9]), np.array([2, 0, 1])),
               (np.array([1, 12]), np.array([1, 0]))]

    criterion = SetCriterion(num_classes=num_classes, eos_coef=eos_coef,
                             losses=('labels', 'cardinality', 'boxes'),
                             grid_chunks=1)   # set 2 on v7x to use both TensorCores
    losses = criterion({'pred_logits': pred_logits, 'pred_boxes': pred_boxes},
                       targets, indices)
    losses = {k: jax.block_until_ready(v) for k, v in losses.items()}

    ref = _reference_losses(np.asarray(pred_logits), np.asarray(pred_boxes),
                            targets, indices, num_classes, eos_coef)
    for k in ('loss_ce', 'cardinality_error', 'loss_bbox', 'loss_giou'):
        got, want = float(losses[k]), float(ref[k])
        assert abs(got - want) < 1e-4, (k, got, want)

    print("KERNEL_OK")
</pallas_src>

<mosaic_0001>
module attributes {stable_mosaic.version = 11 : i64} {
  func.func @_set_criterion_kernel(%arg0: i32, %arg1: memref<2x16x9xf32, #tpu.memory_space<vmem>>, %arg2: memref<2x16x1xi32, #tpu.memory_space<vmem>>, %arg3: memref<1x1x9xf32, #tpu.memory_space<vmem>>, %arg4: memref<2x1x1xf32, #tpu.memory_space<vmem>>, %arg5: memref<2x8x4xf32, #tpu.memory_space<vmem>>, %arg6: memref<2x8x4xf32, #tpu.memory_space<vmem>>, %arg7: memref<2x8x1xf32, #tpu.memory_space<vmem>>, %arg8: memref<1x8x128xf32, #tpu.memory_space<vmem>>) attributes {dimension_semantics = [#tpu.dimension_semantics<parallel>], iteration_bounds = array<i64: 1>, scalar_prefetch = 0 : i64, scratch_operands = 0 : i64, tpu.core_type = #tpu.core_type<tc>, window_params = [{transform_indices = @transform_0, window_bounds = array<i64: 2, 16, 9>}, {transform_indices = @transform_1, window_bounds = array<i64: 2, 16, 1>}, {pipeline_mode = #tpu.pipeline_mode<synchronous>, transform_indices = @transform_2, window_bounds = array<i64: 1, 1, 9>}, {transform_indices = @transform_3, window_bounds = array<i64: 2, 1, 1>}, {transform_indices = @transform_4, window_bounds = array<i64: 2, 8, 4>}, {transform_indices = @transform_5, window_bounds = array<i64: 2, 8, 4>}, {transform_indices = @transform_6, window_bounds = array<i64: 2, 8, 1>}, {transform_indices = @transform_7, window_bounds = array<i64: 1, 8, 128>}]} {
    %c0 = arith.constant 0 : index
    %c0_0 = arith.constant 0 : index
    %c0_1 = arith.constant 0 : index
    %0 = vector.load %arg1[%c0, %c0_0, %c0_1] : memref<2x16x9xf32, #tpu.memory_space<vmem>>, vector<2x16x9xf32>
    %c0_2 = arith.constant 0 : index
    %c0_3 = arith.constant 0 : index
    %c0_4 = arith.constant 0 : index
    %1 = vector.load %arg2[%c0_2, %c0_3, %c0_4] : memref<2x16x1xi32, #tpu.memory_space<vmem>>, vector<2x16x1xi32>
    %c0_5 = arith.constant 0 : index
    %c0_6 = arith.constant 0 : index
    %c0_7 = arith.constant 0 : index
    %2 = vector.load %arg3[%c0_5, %c0_6, %c0_7] : memref<1x1x9xf32, #tpu.memory_space<vmem>>, vector<1x1x9xf32>
    %3 = tpu.iota {dimensions = array<i32: 2>} : vector<2x16x9xi32>
    %cst = arith.constant dense<0xFF800000> : vector<2x16xf32>
    %4 = vector.multi_reduction <maximumf>, %0, %cst [2] : vector<2x16x9xf32> to vector<2x16xf32>
    %5 = vector.shape_cast %4 : vector<2x16xf32> to vector<2x16x1xf32>
    %6 = vector.broadcast %5 : vector<2x16x1xf32> to vector<2x16x9xf32>
    %7 = arith.subf %0, %6 : vector<2x16x9xf32>
    %8 = math.exp %7 : vector<2x16x9xf32>
    %cst_8 = arith.constant dense<0.000000e+00> : vector<2x16xf32>
    %9 = vector.multi_reduction <add>, %8, %cst_8 [2] : vector<2x16x9xf32> to vector<2x16xf32>
    %10 = vector.shape_cast %9 : vector<2x16xf32> to vector<2x16x1xf32>
    %11 = math.log %10 : vector<2x16x1xf32>
    %12 = arith.addf %5, %11 : vector<2x16x1xf32>
    %13 = vector.broadcast %1 : vector<2x16x1xi32> to vector<2x16x9xi32>
    %14 = arith.cmpi eq, %3, %13 : vector<2x16x9xi32>
    %15 = arith.extui %14 : vector<2x16x9xi1> to vector<2x16x9xi32>
    %16 = arith.sitofp %15 : vector<2x16x9xi32> to vector<2x16x9xf32>
    %17 = arith.mulf %0, %16 : vector<2x16x9xf32>
    %cst_9 = arith.constant dense<0.000000e+00> : vector<2x16xf32>
    %18 = vector.multi_reduction <add>, %17, %cst_9 [2] : vector<2x16x9xf32> to vector<2x16xf32>
    %19 = vector.shape_cast %18 : vector<2x16xf32> to vector<2x16x1xf32>
    %20 = vector.broadcast %2 : vector<1x1x9xf32> to vector<2x16x9xf32>
    %21 = arith.mulf %20, %16 : vector<2x16x9xf32>
    %cst_10 = arith.constant dense<0.000000e+00> : vector<2x16xf32>
    %22 = vector.multi_reduction <add>, %21, %cst_10 [2] : vector<2x16x9xf32> to vector<2x16xf32>
    %23 = vector.shape_cast %22 : vector<2x16xf32> to vector<2x16x1xf32>
    %24 = arith.subf %12, %19 : vector<2x16x1xf32>
    %25 = arith.mulf %23, %24 : vector<2x16x1xf32>
    %cst_11 = arith.constant dense<0.000000e+00> : vector<2x16xf32>
    %26 = vector.multi_reduction <add>, %25, %cst_11 [2] : vector<2x16x1xf32> to vector<2x16xf32>
    %27 = vector.shape_cast %26 : vector<2x16xf32> to vector<2x16x1xf32>
    %cst_12 = arith.constant dense<0.000000e+00> : vector<2x1xf32>
    %28 = vector.multi_reduction <add>, %27, %cst_12 [1] : vector<2x16x1xf32> to vector<2x1xf32>
    %29 = vector.shape_cast %28 : vector<2x1xf32> to vector<2x1x1xf32>
    %cst_13 = arith.constant dense<0.000000e+00> : vector<1x1xf32>
    %30 = vector.multi_reduction <add>, %29, %cst_13 [0] : vector<2x1x1xf32> to vector<1x1xf32>
    %31 = vector.shape_cast %30 : vector<1x1xf32> to vector<1x1x1xf32>
    %cst_14 = arith.constant dense<0.000000e+00> : vector<2x16xf32>
    %32 = vector.multi_reduction <add>, %23, %cst_14 [2] : vector<2x16x1xf32> to vector<2x16xf32>
    %33 = vector.shape_cast %32 : vector<2x16xf32> to vector<2x16x1xf32>
    %cst_15 = arith.constant dense<0.000000e+00> : vector<2x1xf32>
    %34 = vector.multi_reduction <add>, %33, %cst_15 [1] : vector<2x16x1xf32> to vector<2x1xf32>
    %35 = vector.shape_cast %34 : vector<2x1xf32> to vector<2x1x1xf32>
    %cst_16 = arith.constant dense<0.000000e+00> : vector<1x1xf32>
    %36 = vector.multi_reduction <add>, %35, %cst_16 [0] : vector<2x1x1xf32> to vector<1x1xf32>
    %37 = vector.shape_cast %36 : vector<1x1xf32> to vector<1x1x1xf32>
    %38 = vector.extract_strided_slice %0 {offsets = [0, 0, 8], sizes = [2, 16, 1], strides = [1, 1, 1]} : vector<2x16x9xf32> to vector<2x16x1xf32>
    %39 = vector.extract_strided_slice %0 {offsets = [0, 0, 0], sizes = [2, 16, 8], strides = [1, 1, 1]} : vector<2x16x9xf32> to vector<2x16x8xf32>
    %cst_17 = arith.constant dense<0xFF800000> : vector<2x16xf32>
    %40 = vector.multi_reduction <maximumf>, %39, %cst_17 [2] : vector<2x16x8xf32> to vector<2x16xf32>
    %41 = vector.shape_cast %40 : vector<2x16xf32> to vector<2x16x1xf32>
    %42 = arith.cmpf oge, %41, %38 : vector<2x16x1xf32>
    %43 = arith.extui %42 : vector<2x16x1xi1> to vector<2x16x1xi32>
    %44 = arith.sitofp %43 : vector<2x16x1xi32> to vector<2x16x1xf32>
    %cst_18 = arith.constant dense<0.000000e+00> : vector<2x1xf32>
    %45 = vector.multi_reduction <add>, %44, %cst_18 [1] : vector<2x16x1xf32> to vector<2x1xf32>
    %46 = vector.shape_cast %45 : vector<2x1xf32> to vector<2x1x1xf32>
    %c0_19 = arith.constant 0 : index
    %c0_20 = arith.constant 0 : index
    %c0_21 = arith.constant 0 : index
    %47 = vector.load %arg4[%c0_19, %c0_20, %c0_21] : memref<2x1x1xf32, #tpu.memory_space<vmem>>, vector<2x1x1xf32>
    %48 = arith.subf %46, %47 : vector<2x1x1xf32>
    %49 = math.absf %48 : vector<2x1x1xf32>
    %cst_22 = arith.constant dense<0.000000e+00> : vector<2x1xf32>
    %50 = vector.multi_reduction <add>, %49, %cst_22 [2] : vector<2x1x1xf32> to vector<2x1xf32>
    %51 = vector.shape_cast %50 : vector<2x1xf32> to vector<2x1x1xf32>
    %cst_23 = arith.constant dense<0.000000e+00> : vector<2x1xf32>
    %52 = vector.multi_reduction <add>, %51, %cst_23 [1] : vector<2x1x1xf32> to vector<2x1xf32>
    %53 = vector.shape_cast %52 : vector<2x1xf32> to vector<2x1x1xf32>
    %cst_24 = arith.constant dense<0.000000e+00> : vector<1x1xf32>
    %54 = vector.multi_reduction <add>, %53, %cst_24 [0] : vector<2x1x1xf32> to vector<1x1xf32>
    %55 = vector.shape_cast %54 : vector<1x1xf32> to vector<1x1x1xf32>
    %c0_25 = arith.constant 0 : index
    %c0_26 = arith.constant 0 : index
    %c0_27 = arith.constant 0 : index
    %56 = vector.load %arg5[%c0_25, %c0_26, %c0_27] : memref<2x8x4xf32, #tpu.memory_space<vmem>>, vector<2x8x4xf32>
    %c0_28 = arith.constant 0 : index
    %c0_29 = arith.constant 0 : index
    %c0_30 = arith.constant 0 : index
    %57 = vector.load %arg6[%c0_28, %c0_29, %c0_30] : memref<2x8x4xf32, #tpu.memory_space<vmem>>, vector<2x8x4xf32>
    %c0_31 = arith.constant 0 : index
    %c0_32 = arith.constant 0 : index
    %c0_33 = arith.constant 0 : index
    %58 = vector.load %arg7[%c0_31, %c0_32, %c0_33] : memref<2x8x1xf32, #tpu.memory_space<vmem>>, vector<2x8x1xf32>
    %59 = arith.subf %56, %57 : vector<2x8x4xf32>
    %60 = math.absf %59 : vector<2x8x4xf32>
    %61 = vector.broadcast %58 : vector<2x8x1xf32> to vector<2x8x4xf32>
    %62 = arith.mulf %60, %61 : vector<2x8x4xf32>
    %cst_34 = arith.constant dense<0.000000e+00> : vector<2x8xf32>
    %63 = vector.multi_reduction <add>, %62, %cst_34 [2] : vector<2x8x4xf32> to vector<2x8xf32>
    %64 = vector.shape_cast %63 : vector<2x8xf32> to vector<2x8x1xf32>
    %cst_35 = arith.constant dense<0.000000e+00> : vector<2x1xf32>
    %65 = vector.multi_reduction <add>, %64, %cst_35 [1] : vector<2x8x1xf32> to vector<2x1xf32>
    %66 = vector.shape_cast %65 : vector<2x1xf32> to vector<2x1x1xf32>
    %cst_36 = arith.constant dense<0.000000e+00> : vector<1x1xf32>
    %67 = vector.multi_reduction <add>, %66, %cst_36 [0] : vector<2x1x1xf32> to vector<1x1xf32>
    %68 = vector.shape_cast %67 : vector<1x1xf32> to vector<1x1x1xf32>
    %69 = vector.extract_strided_slice %56 {offsets = [0, 0, 0], sizes = [2, 8, 1], strides = [1, 1, 1]} : vector<2x8x4xf32> to vector<2x8x1xf32>
    %70 = vector.extract_strided_slice %56 {offsets = [0, 0, 1], sizes = [2, 8, 1], strides = [1, 1, 1]} : vector<2x8x4xf32> to vector<2x8x1xf32>
    %71 = vector.extract_strided_slice %56 {offsets = [0, 0, 2], sizes = [2, 8, 1], strides = [1, 1, 1]} : vector<2x8x4xf32> to vector<2x8x1xf32>
    %72 = vector.extract_strided_slice %56 {offsets = [0, 0, 3], sizes = [2, 8, 1], strides = [1, 1, 1]} : vector<2x8x4xf32> to vector<2x8x1xf32>
    %cst_37 = arith.constant 5.000000e-01 : f32
    %73 = vector.broadcast %cst_37 : f32 to vector<2x8x1xf32>
    %74 = arith.mulf %73, %71 : vector<2x8x1xf32>
    %75 = arith.subf %69, %74 : vector<2x8x1xf32>
    %cst_38 = arith.constant 5.000000e-01 : f32
    %76 = vector.broadcast %cst_38 : f32 to vector<2x8x1xf32>
    %77 = arith.mulf %76, %72 : vector<2x8x1xf32>
    %78 = arith.subf %70, %77 : vector<2x8x1xf32>
    %cst_39 = arith.constant 5.000000e-01 : f32
    %79 = vector.broadcast %cst_39 : f32 to vector<2x8x1xf32>
    %80 = arith.mulf %79, %71 : vector<2x8x1xf32>
    %81 = arith.addf %69, %80 : vector<2x8x1xf32>
    %cst_40 = arith.constant 5.000000e-01 : f32
    %82 = vector.broadcast %cst_40 : f32 to vector<2x8x1xf32>
    %83 = arith.mulf %82, %72 : vector<2x8x1xf32>
    %84 = arith.addf %70, %83 : vector<2x8x1xf32>
    %85 = vector.extract_strided_slice %57 {offsets = [0, 0, 0], sizes = [2, 8, 1], strides = [1, 1, 1]} : vector<2x8x4xf32> to vector<2x8x1xf32>
    %86 = vector.extract_strided_slice %57 {offsets = [0, 0, 1], sizes = [2, 8, 1], strides = [1, 1, 1]} : vector<2x8x4xf32> to vector<2x8x1xf32>
    %87 = vector.extract_strided_slice %57 {offsets = [0, 0, 2], sizes = [2, 8, 1], strides = [1, 1, 1]} : vector<2x8x4xf32> to vector<2x8x1xf32>
    %88 = vector.extract_strided_slice %57 {offsets = [0, 0, 3], sizes = [2, 8, 1], strides = [1, 1, 1]} : vector<2x8x4xf32> to vector<2x8x1xf32>
    %cst_41 = arith.constant 5.000000e-01 : f32
    %89 = vector.broadcast %cst_41 : f32 to vector<2x8x1xf32>
    %90 = arith.mulf %89, %87 : vector<2x8x1xf32>
    %91 = arith.subf %85, %90 : vector<2x8x1xf32>
    %cst_42 = arith.constant 5.000000e-01 : f32
    %92 = vector.broadcast %cst_42 : f32 to vector<2x8x1xf32>
    %93 = arith.mulf %92, %88 : vector<2x8x1xf32>
    %94 = arith.subf %86, %93 : vector<2x8x1xf32>
    %cst_43 = arith.constant 5.000000e-01 : f32
    %95 = vector.broadcast %cst_43 : f32 to vector<2x8x1xf32>
    %96 = arith.mulf %95, %87 : vector<2x8x1xf32>
    %97 = arith.addf %85, %96 : vector<2x8x1xf32>
    %cst_44 = arith.constant 5.000000e-01 : f32
    %98 = vector.broadcast %cst_44 : f32 to vector<2x8x1xf32>
    %99 = arith.mulf %98, %88 : vector<2x8x1xf32>
    %100 = arith.addf %86, %99 : vector<2x8x1xf32>
    %101 = arith.subf %81, %75 : vector<2x8x1xf32>
    %102 = arith.subf %84, %78 : vector<2x8x1xf32>
    %103 = arith.mulf %101, %102 : vector<2x8x1xf32>
    %104 = arith.subf %97, %91 : vector<2x8x1xf32>
    %105 = arith.subf %100, %94 : vector<2x8x1xf32>
    %106 = arith.mulf %104, %105 : vector<2x8x1xf32>
    %107 = arith.minimumf %81, %97 : vector<2x8x1xf32>
    %108 = arith.maximumf %75, %91 : vector<2x8x1xf32>
    %109 = arith.subf %107, %108 : vector<2x8x1xf32>
    %cst_45 = arith.constant 0.000000e+00 : f32
    %110 = vector.broadcast %cst_45 : f32 to vector<2x8x1xf32>
    %111 = arith.maximumf %109, %110 : vector<2x8x1xf32>
    %112 = arith.minimumf %84, %100 : vector<2x8x1xf32>
    %113 = arith.maximumf %78, %94 : vector<2x8x1xf32>
    %114 = arith.subf %112, %113 : vector<2x8x1xf32>
    %cst_46 = arith.constant 0.000000e+00 : f32
    %115 = vector.broadcast %cst_46 : f32 to vector<2x8x1xf32>
    %116 = arith.maximumf %114, %115 : vector<2x8x1xf32>
    %117 = arith.mulf %111, %116 : vector<2x8x1xf32>
    %118 = arith.addf %103, %106 : vector<2x8x1xf32>
    %119 = arith.subf %118, %117 : vector<2x8x1xf32>
    %120 = arith.divf %117, %119 : vector<2x8x1xf32>
    %121 = arith.maximumf %81, %97 : vector<2x8x1xf32>
    %122 = arith.minimumf %75, %91 : vector<2x8x1xf32>
    %123 = arith.subf %121, %122 : vector<2x8x1xf32>
    %124 = arith.maximumf %84, %100 : vector<2x8x1xf32>
    %125 = arith.minimumf %78, %94 : vector<2x8x1xf32>
    %126 = arith.subf %124, %125 : vector<2x8x1xf32>
    %127 = arith.mulf %123, %126 : vector<2x8x1xf32>
    %128 = arith.subf %127, %119 : vector<2x8x1xf32>
    %129 = arith.divf %128, %127 : vector<2x8x1xf32>
    %130 = arith.subf %120, %129 : vector<2x8x1xf32>
    %cst_47 = arith.constant 1.000000e+00 : f32
    %131 = vector.broadcast %cst_47 : f32 to vector<2x8x1xf32>
    %132 = arith.subf %131, %130 : vector<2x8x1xf32>
    %133 = arith.mulf %132, %58 : vector<2x8x1xf32>
    %cst_48 = arith.constant dense<0.000000e+00> : vector<2x8xf32>
    %134 = vector.multi_reduction <add>, %133, %cst_48 [2] : vector<2x8x1xf32> to vector<2x8xf32>
    %135 = vector.shape_cast %134 : vector<2x8xf32> to vector<2x8x1xf32>
    %cst_49 = arith.constant dense<0.000000e+00> : vector<2x1xf32>
    %136 = vector.multi_reduction <add>, %135, %cst_49 [1] : vector<2x8x1xf32> to vector<2x1xf32>
    %137 = vector.shape_cast %136 : vector<2x1xf32> to vector<2x1x1xf32>
    %cst_50 = arith.constant dense<0.000000e+00> : vector<1x1xf32>
    %138 = vector.multi_reduction <add>, %137, %cst_50 [0] : vector<2x1x1xf32> to vector<1x1xf32>
    %139 = vector.shape_cast %138 : vector<1x1xf32> to vector<1x1x1xf32>
    %140 = tpu.iota {dimensions = array<i32: 1>} : vector<1x8x128xi32>
    %141 = tpu.iota {dimensions = array<i32: 2>} : vector<1x8x128xi32>
    %c0_i32 = arith.constant 0 : i32
    %142 = vector.broadcast %c0_i32 : i32 to vector<1x8x128xi32>
    %143 = arith.cmpi eq, %140, %142 : vector<1x8x128xi32>
    %c0_i32_51 = arith.constant 0 : i32
    %144 = vector.broadcast %c0_i32_51 : i32 to vector<1x8x128xi32>
    %145 = arith.cmpi eq, %141, %144 : vector<1x8x128xi32>
    %146 = arith.andi %143, %145 : vector<1x8x128xi1>
    %cst_52 = arith.constant 0.000000e+00 : f32
    %147 = vector.shape_cast %31 : vector<1x1x1xf32> to vector<1x1x1xf32>
    %148 = vector.broadcast %147 : vector<1x1x1xf32> to vector<1x8x128xf32>
    %149 = vector.broadcast %cst_52 : f32 to vector<1x8x128xf32>
    %150 = arith.select %146, %148, %149 : vector<1x8x128xi1>, vector<1x8x128xf32>
    %c1_i32 = arith.constant 1 : i32
    %151 = vector.broadcast %c1_i32 : i32 to vector<1x8x128xi32>
    %152 = arith.cmpi eq, %141, %151 : vector<1x8x128xi32>
    %153 = arith.andi %143, %152 : vector<1x8x128xi1>
    %cst_53 = arith.constant 0.000000e+00 : f32
    %154 = vector.shape_cast %37 : vector<1x1x1xf32> to vector<1x1x1xf32>
    %155 = vector.broadcast %154 : vector<1x1x1xf32> to vector<1x8x128xf32>
    %156 = vector.broadcast %cst_53 : f32 to vector<1x8x128xf32>
    %157 = arith.select %153, %155, %156 : vector<1x8x128xi1>, vector<1x8x128xf32>
    %158 = arith.addf %150, %157 : vector<1x8x128xf32>
    %c2_i32 = arith.constant 2 : i32
    %159 = vector.broadcast %c2_i32 : i32 to vector<1x8x128xi32>
    %160 = arith.cmpi eq, %141, %159 : vector<1x8x128xi32>
    %161 = arith.andi %143, %160 : vector<1x8x128xi1>
    %cst_54 = arith.constant 0.000000e+00 : f32
    %162 = vector.shape_cast %55 : vector<1x1x1xf32> to vector<1x1x1xf32>
    %163 = vector.broadcast %162 : vector<1x1x1xf32> to vector<1x8x128xf32>
    %164 = vector.broadcast %cst_54 : f32 to vector<1x8x128xf32>
    %165 = arith.select %161, %163, %164 : vector<1x8x128xi1>, vector<1x8x128xf32>
    %166 = arith.addf %158, %165 : vector<1x8x128xf32>
    %c3_i32 = arith.constant 3 : i32
    %167 = vector.broadcast %c3_i32 : i32 to vector<1x8x128xi32>
    %168 = arith.cmpi eq, %141, %167 : vector<1x8x128xi32>
    %169 = arith.andi %143, %168 : vector<1x8x128xi1>
    %cst_55 = arith.constant 0.000000e+00 : f32
    %170 = vector.shape_cast %68 : vector<1x1x1xf32> to vector<1x1x1xf32>
    %171 = vector.broadcast %170 : vector<1x1x1xf32> to vector<1x8x128xf32>
    %172 = vector.broadcast %cst_55 : f32 to vector<1x8x128xf32>
    %173 = arith.select %169, %171, %172 : vector<1x8x128xi1>, vector<1x8x128xf32>
    %174 = arith.addf %166, %173 : vector<1x8x128xf32>
    %c4_i32 = arith.constant 4 : i32
    %175 = vector.broadcast %c4_i32 : i32 to vector<1x8x128xi32>
    %176 = arith.cmpi eq, %141, %175 : vector<1x8x128xi32>
    %177 = arith.andi %143, %176 : vector<1x8x128xi1>
    %cst_56 = arith.constant 0.000000e+00 : f32
    %178 = vector.shape_cast %139 : vector<1x1x1xf32> to vector<1x1x1xf32>
    %179 = vector.broadcast %178 : vector<1x1x1xf32> to vector<1x8x128xf32>
    %180 = vector.broadcast %cst_56 : f32 to vector<1x8x128xf32>
    %181 = arith.select %177, %179, %180 : vector<1x8x128xi1>, vector<1x8x128xf32>
    %182 = arith.addf %174, %181 : vector<1x8x128xf32>
    %c0_57 = arith.constant 0 : index
    %c0_58 = arith.constant 0 : index
    %c0_59 = arith.constant 0 : index
    %183 = vector.load %arg8[%c0_57, %c0_58, %c0_59] : memref<1x8x128xf32, #tpu.memory_space<vmem>>, vector<1x8x128xf32>
    tpu.vector_store %arg8[%c0_57, %c0_58, %c0_59], %182 {strides = array<i32>} : memref<1x8x128xf32, #tpu.memory_space<vmem>>, vector<1x8x128xf32>,
    return
  }
  func.func @transform_0(%arg0: i32) -> (i32, i32, i32) {
    %c0_i32 = arith.constant 0 : i32
    %c0_i32_0 = arith.constant 0 : i32
    %c0_i32_1 = arith.constant 0 : i32
    return %arg0, %c0_i32, %c0_i32_0 : i32, i32, i32
  }
  func.func @transform_1(%arg0: i32) -> (i32, i32, i32) {
    %c0_i32 = arith.constant 0 : i32
    %c0_i32_0 = arith.constant 0 : i32
    %c0_i32_1 = arith.constant 0 : i32
    return %arg0, %c0_i32, %c0_i32_0 : i32, i32, i32
  }
  func.func @transform_2(%arg0: i32) -> (i32, i32, i32) {
    %c0_i32 = arith.constant 0 : i32
    %c0_i32_0 = arith.constant 0 : i32
    %c0_i32_1 = arith.constant 0 : i32
    %c0_i32_2 = arith.constant 0 : i32
    return %c0_i32, %c0_i32_0, %c0_i32_1 : i32, i32, i32
  }
  func.func @transform_3(%arg0: i32) -> (i32, i32, i32) {
    %c0_i32 = arith.constant 0 : i32
    %c0_i32_0 = arith.constant 0 : i32
    %c0_i32_1 = arith.constant 0 : i32
    return %arg0, %c0_i32, %c0_i32_0 : i32, i32, i32
  }
  func.func @transform_4(%arg0: i32) -> (i32, i32, i32) {
    %c0_i32 = arith.constant 0 : i32
    %c0_i32_0 = arith.constant 0 : i32
    %c0_i32_1 = arith.constant 0 : i32
    return %arg0, %c0_i32, %c0_i32_0 : i32, i32, i32
  }
  func.func @transform_5(%arg0: i32) -> (i32, i32, i32) {
    %c0_i32 = arith.constant 0 : i32
    %c0_i32_0 = arith.constant 0 : i32
    %c0_i32_1 = arith.constant 0 : i32
    return %arg0, %c0_i32, %c0_i32_0 : i32, i32, i32
  }
  func.func @transform_6(%arg0: i32) -> (i32, i32, i32) {
    %c0_i32 = arith.constant 0 : i32
    %c0_i32_0 = arith.constant 0 : i32
    %c0_i32_1 = arith.constant 0 : i32
    return %arg0, %c0_i32, %c0_i32_0 : i32, i32, i32
  }
  func.func @transform_7(%arg0: i32) -> (i32, i32, i32) {
    %c0_i32 = arith.constant 0 : i32
    %c0_i32_0 = arith.constant 0 : i32
    %c0_i32_1 = arith.constant 0 : i32
    return %arg0, %c0_i32, %c0_i32_0 : i32, i32, i32
  }
}

</mosaic_0001>

<llo_original>
// kernel: tpu_custom_call.1
$region0: #{tpu_custom_call.1}
  #allocation0 [shape = 'u32[]', space=smem, size = 0x4, offset = 0x4, fixed_abs, tag = 'smem constant byte address 0x4 - core index']
  #allocation1 [shape = 'u32[144,128]{1,0:T(1,128)}', space=vmem, size = 0x12000, scoped, tag = 'internal scratch']
  %s0 = inlined_call_operand.vmem [shape: f32[2,16,9], index: 0, kind: input, shape index: {}]
  %s1 = inlined_call_operand.vmem [shape: s32[2,16,1], index: 1, kind: input, shape index: {}]
  %s2 = inlined_call_operand.vmem [shape: f32[1,1,9], index: 2, kind: input, shape index: {}]
  %s3 = inlined_call_operand.vmem [shape: f32[2,1,1], index: 3, kind: input, shape index: {}]
  %s4 = inlined_call_operand.vmem [shape: f32[2,8,4], index: 4, kind: input, shape index: {}]
  %s5 = inlined_call_operand.vmem [shape: f32[2,8,4], index: 5, kind: input, shape index: {}]
  %s6 = inlined_call_operand.vmem [shape: f32[2,8,1], index: 6, kind: input, shape index: {}]
  %s7 = inlined_call_operand.hbm [shape: f32[1,8,128], index: 7, kind: output, shape index: {}]
  %s8 = sld [smem:[#allocation0]]
  $region38: #{tpu_custom_call.1} parent=0
    _
  %s10 = ssub.s32 1, %s8
  %s11 = scalar_select 0, %s10, %s8
  $region1: #{tpu_custom_call.1} parent=0
    #allocation2 [shape = 'u8[4096]{0}', space=vmem, size = 0x1000, scoped, tag = 'output window, operand 0, single buffered']
    #allocation3 [shape = 's32[1]{0}', space=sflag, size = 0x4, scoped, tag = 'scoped memory for tpu_custom_call.1']
    %12 = vsyncpa [#allocation3], 0
    // Predicated region
    $region2: #{tpu_custom_call.1} parent=1 // pred_check
      _
    $region3: #{tpu_custom_call.1} parent=1 // pred_check_branch
      %14 = sbr.rel (0) target = $region5
    $region4: #{tpu_custom_call.1} parent=1 // pred_region
      _
    $region5: #{tpu_custom_call.1} parent=1 // pred_fallthru
      _
    // Predicated region
    $region6: #{tpu_custom_call.1} parent=1 // pred_check
      _
    $region7: #{tpu_custom_call.1} parent=1 // pred_check_branch
      %16 = sbr.rel (0) target = $region9
    $region8: #{tpu_custom_call.1} parent=1 // pred_region
      _
    $region9: #{tpu_custom_call.1} parent=1 // pred_fallthru
      _
    // Predicated region
    $region10: #{tpu_custom_call.1} parent=1 // pred_check
      _
    $region11: #{tpu_custom_call.1} parent=1 // pred_check_branch
      %18 = sbr.rel (0) target = $region13
    $region12: #{tpu_custom_call.1} parent=1 // pred_region
      _
    $region13: #{tpu_custom_call.1} parent=1 // pred_fallthru
      _
    // Predicated region
    $region14: #{tpu_custom_call.1} parent=1 // pred_check
      _
    $region15: #{tpu_custom_call.1} parent=1 // pred_check_branch
      %20 = sbr.rel (0) target = $region17
    $region16: #{tpu_custom_call.1} parent=1 // pred_region
      _
    $region17: #{tpu_custom_call.1} parent=1 // pred_fallthru
      _
    // Predicated region
    $region18: #{tpu_custom_call.1} parent=1 // pred_check
      _
    $region19: #{tpu_custom_call.1} parent=1 // pred_check_branch
      %22 = sbr.rel (0) target = $region21
    $region20: #{tpu_custom_call.1} parent=1 // pred_region
      _
    $region21: #{tpu_custom_call.1} parent=1 // pred_fallthru
      _
    // Predicated region
    $region22: #{tpu_custom_call.1} parent=1 // pred_check
      _
    $region23: #{tpu_custom_call.1} parent=1 // pred_check_branch
      %24 = sbr.rel (0) target = $region25
    $region24: #{tpu_custom_call.1} parent=1 // pred_region
      _
    $region25: #{tpu_custom_call.1} parent=1 // pred_fallthru
      _
    // Predicated region
    $region26: #{tpu_custom_call.1} parent=1 // pred_check
      _
    $region27: #{tpu_custom_call.1} parent=1 // pred_check_branch
      %26 = sbr.rel (0) target = $region29
    $region28: #{tpu_custom_call.1} parent=1 // pred_region
      _
    $region29: #{tpu_custom_call.1} parent=1 // pred_fallthru
      _
    %v27 = vld [vmem:[%s0] sm:$0xff]
    %v28 = vld [vmem:[%s0 + $0x8] sm:$0xff]
    %v29 = vld [vmem:[%s0 + $0x10] sm:$0xff]
    %v30 = vld [vmem:[%s0 + $0x18] sm:$0xff]
    %v31 = vld [vmem:[%s1] sm:$0xff]
    %v32 = vld [vmem:[%s1 + $0x8] sm:$0xff]
    %v33 = vld [vmem:[%s1 + $0x10] sm:$0xff]
    %v34 = vld [vmem:[%s1 + $0x18] sm:$0xff]
    %v35 = vld [vmem:[%s2] sm:$0x1]
    %v36 = vlaneseq
    %v37 = vand.u32 %v36, 127
    %vm38 = vcmask 72704
    %v39 = vsel %vm38, %v27, -inf
    %40 = vmax.xlane.f32.xlu0 %v39
    %v41 = vpop.xlane.xlu0 %40
    %v42 = vsel %vm38, %v28, -inf
    %43 = vmax.xlane.f32.xlu0 %v42
    %v44 = vpop.xlane.xlu0 %43
    %v45 = vsel %vm38, %v29, -inf
    %46 = vmax.xlane.f32.xlu0 %v45
    %v47 = vpop.xlane.xlu0 %46
    %v48 = vsel %vm38, %v30, -inf
    %49 = vmax.xlane.f32.xlu0 %v48
    %v50 = vpop.xlane.xlu0 %49
    %v51 = vsub.f32 %v27, %v41
    %v52 = vsub.f32 %v28, %v44
    %v53 = vsub.f32 %v29, %v47
    %v54 = vsub.f32 %v30, %v50
    %v55 = vmul.f32 %v51, 1.442695
    %v56 = vpow.pop %v55
    %v57 = vmul.f32 %v52, 1.442695
    %v58 = vpow.pop %v57
    %v59 = vmul.f32 %v53, 1.442695
    %v60 = vpow.pop %v59
    %v61 = vmul.f32 %v54, 1.442695
    %v62 = vpow.pop %v61
    %v63 = vsel %vm38, %v56, 0.0
    %64 = vadd.xlane.f32.xlu0 %v63
    %v65 = vpop.xlane.xlu0 %64
    %v66 = vsel %vm38, %v58, 0.0
    %67 = vadd.xlane.f32.xlu0 %v66
    %v68 = vpop.xlane.xlu0 %67
    %v69 = vsel %vm38, %v60, 0.0
    %70 = vadd.xlane.f32.xlu0 %v69
    %v71 = vpop.xlane.xlu0 %70
    %v72 = vsel %vm38, %v62, 0.0
    %73 = vadd.xlane.f32.xlu0 %v72
    %v74 = vpop.xlane.xlu0 %73
    %v75 = vlog2.pop %v65
    %v76 = vmul.f32 %v75, 0.6931472
    %v77 = vlog2.pop %v68
    %v78 = vmul.f32 %v77, 0.6931472
    %v79 = vlog2.pop %v71
    %v80 = vmul.f32 %v79, 0.6931472
    %v81 = vlog2.pop %v74
    %v82 = vmul.f32 %v81, 0.6931472
    %v83 = vadd.f32 %v41, %v76
    %v84 = vadd.f32 %v44, %v78
    %v85 = vadd.f32 %v47, %v80
    %v86 = vadd.f32 %v50, %v82
    %87 = vset.pattern.permute.xlu0 0
    %88 = vperm.xlu0 %87, %v31
    %v89 = vpop.permute.xlu0 %88
    %90 = vset.pattern.permute.xlu0 0
    %91 = vperm.xlu0 %90, %v32
    %v92 = vpop.permute.xlu0 %91
    %93 = vset.pattern.permute.xlu0 0
    %94 = vperm.xlu0 %93, %v33
    %v95 = vpop.permute.xlu0 %94
    %96 = vset.pattern.permute.xlu0 0
    %97 = vperm.xlu0 %96, %v34
    %v98 = vpop.permute.xlu0 %97
    %vm99 = vcmp.eq.s32.totalorder %v37, %v89
    %vm100 = vcmp.eq.s32.totalorder %v37, %v92
    %vm101 = vcmp.eq.s32.totalorder %v37, %v95
    %vm102 = vcmp.eq.s32.totalorder %v37, %v98
    %v103 = vsel %vm99, 1, 0
    %v104 = vsel %vm100, 1, 0
    %v105 = vsel %vm101, 1, 0
    %v106 = vsel %vm102, 1, 0
    %v107 = vcvt.s32.f32 %v103
    %v108 = vcvt.s32.f32 %v104
    %v109 = vcvt.s32.f32 %v105
    %v110 = vcvt.s32.f32 %v106
    %v111 = vmul.f32 %v27, %v107
    %v112 = vmul.f32 %v28, %v108
    %v113 = vmul.f32 %v29, %v109
    %v114 = vmul.f32 %v30, %v110
    %v115 = vsel %vm38, %v111, 0.0
    %116 = vadd.xlane.f32.xlu0 %v115
    %v117 = vpop.xlane.xlu0 %116
    %v118 = vsel %vm38, %v112, 0.0
    %119 = vadd.xlane.f32.xlu0 %v118
    %v120 = vpop.xlane.xlu0 %119
    %v121 = vsel %vm38, %v113, 0.0
    %122 = vadd.xlane.f32.xlu0 %v121
    %v123 = vpop.xlane.xlu0 %122
    %v124 = vsel %vm38, %v114, 0.0
    %125 = vadd.xlane.f32.xlu0 %v124
    %v126 = vpop.xlane.xlu0 %125
    %v128 = vlaneseq
    %v129 = vshrl.u32 %v128, 7
    %v130 = vsub.s32 0, %v129
    %v131 = vrot.slane %v35, %v130
    %v133 = vmul.f32 %v131, %v107
    %v134 = vmul.f32 %v131, %v108
    %v135 = vmul.f32 %v131, %v109
    %v136 = vmul.f32 %v131, %v110
    %v137 = vsel %vm38, %v133, 0.0
    %138 = vadd.xlane.f32.xlu0 %v137
    %v139 = vpop.xlane.xlu0 %138
    %v140 = vsel %vm38, %v134, 0.0
    %141 = vadd.xlane.f32.xlu0 %v140
    %v142 = vpop.xlane.xlu0 %141
    %v143 = vsel %vm38, %v135, 0.0
    %144 = vadd.xlane.f32.xlu0 %v143
    %v145 = vpop.xlane.xlu0 %144
    %v146 = vsel %vm38, %v136, 0.0
    %147 = vadd.xlane.f32.xlu0 %v146
    %v148 = vpop.xlane.xlu0 %147
    %v149 = vsub.f32 %v83, %v117
    %v150 = vsub.f32 %v84, %v120
    %v151 = vsub.f32 %v85, %v123
    %v152 = vsub.f32 %v86, %v126
    %v153 = vmul.f32 %v139, %v149
    %v154 = vmul.f32 %v142, %v150
    %v155 = vmul.f32 %v145, %v151
    %v156 = vmul.f32 %v148, %v152
    %v157 = vadd.f32 %v153, 0.0
    %v158 = vadd.f32 %v154, 0.0
    %v159 = vadd.f32 %v155, 0.0
    %v160 = vadd.f32 %v156, 0.0
    %v161 = vadd.f32 %v157, %v158
    %v162 = vrot.slane %v161, 4
    %v163 = vadd.f32 %v161, %v162
    %v164 = vrot.slane %v163, 2
    %v165 = vadd.f32 %v163, %v164
    %v166 = vrot.slane %v165, 1
    %v167 = vadd.f32 %v165, %v166
    %v168 = vadd.f32 %v159, %v160
    %v169 = vrot.slane %v168, 4
    %v170 = vadd.f32 %v168, %v169
    %v171 = vrot.slane %v170, 2
    %v172 = vadd.f32 %v170, %v171
    %v173 = vrot.slane %v172, 1
    %v174 = vadd.f32 %v172, %v173
    %v175 = vadd.f32 %v167, %v174
    %v176 = vadd.f32 %v139, 0.0
    %v177 = vadd.f32 %v142, 0.0
    %v178 = vadd.f32 %v145, 0.0
    %v179 = vadd.f32 %v148, 0.0
    %v180 = vadd.f32 %v176, %v177
    %v181 = vrot.slane %v180, 4
    %v182 = vadd.f32 %v180, %v181
    %v183 = vrot.slane %v182, 2
    %v184 = vadd.f32 %v182, %v183
    %v185 = vrot.slane %v184, 1
    %v186 = vadd.f32 %v184, %v185
    %v187 = vadd.f32 %v178, %v179
    %v188 = vrot.slane %v187, 4
    %v189 = vadd.f32 %v187, %v188
    %v190 = vrot.slane %v189, 2
    %v191 = vadd.f32 %v189, %v190
    %v192 = vrot.slane %v191, 1
    %v193 = vadd.f32 %v191, %v192
    %v194 = vadd.f32 %v186, %v193
    %vm195 = vcmask 64512
    %v196 = vsel %vm195, %v27, -inf
    %197 = vmax.xlane.f32.xlu0 %v196
    %v198 = vpop.xlane.xlu0 %197
    %v199 = vsel %vm195, %v28, -inf
    %200 = vmax.xlane.f32.xlu0 %v199
    %v201 = vpop.xlane.xlu0 %200
    %v202 = vsel %vm195, %v29, -inf
    %203 = vmax.xlane.f32.xlu0 %v202
    %v204 = vpop.xlane.xlu0 %203
    %v205 = vsel %vm195, %v30, -inf
    %206 = vmax.xlane.f32.xlu0 %v205
    %v207 = vpop.xlane.xlu0 %206
    %vm208 = vcmp.ge.f32.partialorder %v198, %v27
    %vm209 = vcmp.ge.f32.partialorder %v201, %v28
    %vm210 = vcmp.ge.f32.partialorder %v204, %v29
    %vm211 = vcmp.ge.f32.partialorder %v207, %v30
    %v212 = vsel %vm208, 1, 0
    %v213 = vsel %vm209, 1, 0
    %v214 = vsel %vm210, 1, 0
    %v215 = vsel %vm211, 1, 0
    %v216 = vcvt.s32.f32 %v212
    %v217 = vcvt.s32.f32 %v213
    %v218 = vcvt.s32.f32 %v214
    %v219 = vcvt.s32.f32 %v215
    %vm220 = vcmask 72768
    %v221 = vsel %vm220, %v216, 0.0
    %v222 = vsel %vm220, %v217, 0.0
    %v223 = vadd.f32 %v221, %v222
    %v224 = vrot.slane %v223, 4
    %v225 = vadd.f32 %v223, %v224
    %v226 = vrot.slane %v225, 2
    %v227 = vadd.f32 %v225, %v226
    %v228 = vrot.slane %v227, 1
    %v229 = vadd.f32 %v227, %v228
    %v230 = vsel %vm220, %v218, 0.0
    %v231 = vsel %vm220, %v219, 0.0
    %v232 = vadd.f32 %v230, %v231
    %v233 = vrot.slane %v232, 4
    %v234 = vadd.f32 %v232, %v233
    %v235 = vrot.slane %v234, 2
    %v236 = vadd.f32 %v234, %v235
    %v237 = vrot.slane %v236, 1
    %v238 = vadd.f32 %v236, %v237
    %v239 = vld [vmem:[%s3] sm:$0x1]
    %v240 = vld [vmem:[%s3 + $0x1] sm:$0x1]
    %v243 = vlaneseq
    %v244 = vshrl.u32 %v243, 7
    %v245 = vsub.s32 0, %v244
    %v246 = vrot.slane %v239, %v245
    %v247 = vlaneseq
    %v248 = vshrl.u32 %v247, 7
    %v249 = vsub.s32 0, %v248
    %v250 = vrot.slane %v240, %v249
    %251 = vrot.lane.b32.xlu0 %v246, 8
    %v252 = vpop.permute.xlu0 %251
    %253 = vrot.lane.b32.xlu0 %v250, 8
    %v254 = vpop.permute.xlu0 %253
    %v257 = vsub.f32 %v229, %v252
    %v258 = vsub.f32 %v238, %v254
    %v259 = vand.u32 2147483647, %v257
    %v260 = vand.u32 2147483647, %v258
    %v261 = vadd.f32 %v259, 0.0
    %v262 = vadd.f32 %v260, 0.0
    %v263 = vadd.f32 %v261, 0.0
    %v264 = vadd.f32 %v262, 0.0
    %vm265 = vcmask 65600
    %v266 = vsel %vm265, %v263, 0.0
    %v267 = vsel %vm265, %v264, 0.0
    %v268 = vadd.f32 %v266, %v267
    %v269 = vld [vmem:[%s4] sm:$0xff]
    %v270 = vld [vmem:[%s4 + $0x8] sm:$0xff]
    %v271 = vld [vmem:[%s5] sm:$0xff]
    %v272 = vld [vmem:[%s5 + $0x8] sm:$0xff]
    %v273 = vld [vmem:[%s6] sm:$0xff]
    %v274 = vld [vmem:[%s6 + $0x8] sm:$0xff]
    %v275 = vsub.f32 %v269, %v271
    %v276 = vsub.f32 %v270, %v272
    %v277 = vand.u32 2147483647, %v275
    %v278 = vand.u32 2147483647, %v276
    %280 = vset.pattern.permute.xlu0 0
    %281 = vperm.xlu0 %280, %v273
    %v282 = vpop.permute.xlu0 %281
    %285 = vset.pattern.permute.xlu0 0
    %286 = vperm.xlu0 %285, %v274
    %v287 = vpop.permute.xlu0 %286
    %v289 = vmul.f32 %v277, %v282
    %v290 = vmul.f32 %v278, %v287
    %vm291 = vcmask 31744
    %v292 = vsel %vm291, %v289, 0.0
    %293 = vadd.xlane.f32.xlu0 %v292
    %v294 = vpop.xlane.xlu0 %293
    %v295 = vsel %vm291, %v290, 0.0
    %296 = vadd.xlane.f32.xlu0 %v295
    %v297 = vpop.xlane.xlu0 %296
    %v298 = vrot.slane %v294, 4
    %v299 = vadd.f32 %v294, %v298
    %v300 = vrot.slane %v299, 2
    %v301 = vadd.f32 %v299, %v300
    %v302 = vrot.slane %v301, 1
    %v303 = vadd.f32 %v301, %v302
    %v304 = vrot.slane %v297, 4
    %v305 = vadd.f32 %v297, %v304
    %v306 = vrot.slane %v305, 2
    %v307 = vadd.f32 %v305, %v306
    %v308 = vrot.slane %v307, 1
    %v309 = vadd.f32 %v307, %v308
    %v310 = vadd.f32 %v303, %v309
    %v311 = vmul.f32 %v269, 0.5
    %v312 = vmul.f32 %v270, 0.5
    %315 = vrot.lane.b32.xlu0 %v311, 126
    %v316 = vpop.permute.xlu0 %315
    %317 = vrot.lane.b32.xlu0 %v312, 126
    %v318 = vpop.permute.xlu0 %317
    %v321 = vsub.f32 %v269, %v316
    %v322 = vsub.f32 %v270, %v318
    %v323 = vadd.f32 %v269, %v316
    %v324 = vadd.f32 %v270, %v318
    %v325 = vmul.f32 %v271, 0.5
    %v326 = vmul.f32 %v272, 0.5
    %329 = vrot.lane.b32.xlu0 %v325, 126
    %v330 = vpop.permute.xlu0 %329
    %331 = vrot.lane.b32.xlu0 %v326, 126
    %v332 = vpop.permute.xlu0 %331
    %v335 = vsub.f32 %v271, %v330
    %v336 = vsub.f32 %v272, %v332
    %v337 = vadd.f32 %v271, %v330
    %v338 = vadd.f32 %v272, %v332
    %v339 = vsub.f32 %v323, %v321
    %v340 = vsub.f32 %v324, %v322
    %343 = vrot.lane.b32.xlu0 %v339, 127
    %v344 = vpop.permute.xlu0 %343
    %345 = vrot.lane.b32.xlu0 %v340, 127
    %v346 = vpop.permute.xlu0 %345
    %v349 = vmul.f32 %v339, %v344
    %v350 = vmul.f32 %v340, %v346
    %v351 = vsub.f32 %v337, %v335
    %v352 = vsub.f32 %v338, %v336
    %355 = vrot.lane.b32.xlu0 %v351, 127
    %v356 = vpop.permute.xlu0 %355
    %357 = vrot.lane.b32.xlu0 %v352, 127
    %v358 = vpop.permute.xlu0 %357
    %v361 = vmul.f32 %v351, %v356
    %v362 = vmul.f32 %v352, %v358
    %v363 = vmin.f32 %v323, %v337
    %v364 = vmin.f32 %v324, %v338
    %v365 = vmax.f32 %v321, %v335
    %v366 = vmax.f32 %v322, %v336
    %v367 = vsub.f32 %v363, %v365
    %v368 = vsub.f32 %v364, %v366
    %v369 = vmax.f32 %v367, 0.0
    %v370 = vmax.f32 %v368, 0.0
    %373 = vrot.lane.b32.xlu0 %v369, 127
    %v374 = vpop.permute.xlu0 %373
    %375 = vrot.lane.b32.xlu0 %v370, 127
    %v376 = vpop.permute.xlu0 %375
    %v379 = vmul.f32 %v369, %v374
    %v380 = vmul.f32 %v370, %v376
    %v381 = vadd.f32 %v349, %v361
    %v382 = vadd.f32 %v350, %v362
    %v383 = vsub.f32 %v381, %v379
    %v384 = vsub.f32 %v382, %v380
    %v385 = vrcp.pop %v383
    %v386 = vmul.f32 %v379, %v385
    %v387 = vrcp.pop %v384
    %v388 = vmul.f32 %v380, %v387
    %v389 = vmax.f32 %v323, %v337
    %v390 = vmax.f32 %v324, %v338
    %v391 = vmin.f32 %v321, %v335
    %v392 = vmin.f32 %v322, %v336
    %v393 = vsub.f32 %v389, %v391
    %v394 = vsub.f32 %v390, %v392
    %397 = vrot.lane.b32.xlu0 %v393, 127
    %v398 = vpop.permute.xlu0 %397
    %399 = vrot.lane.b32.xlu0 %v394, 127
    %v400 = vpop.permute.xlu0 %399
    %v403 = vmul.f32 %v393, %v398
    %v404 = vmul.f32 %v394, %v400
    %v405 = vsub.f32 %v403, %v383
    %v406 = vsub.f32 %v404, %v384
    %v407 = vrcp.pop %v403
    %v408 = vmul.f32 %v405, %v407
    %v409 = vrcp.pop %v404
    %v410 = vmul.f32 %v406, %v409
    %v411 = vsub.f32 %v386, %v408
    %v412 = vsub.f32 %v388, %v410
    %v413 = vsub.f32 1.0, %v411
    %v414 = vsub.f32 1.0, %v412
    %v415 = vmul.f32 %v413, %v273
    %v416 = vmul.f32 %v414, %v274
    %v417 = vadd.f32 %v415, 0.0
    %v418 = vadd.f32 %v416, 0.0
    %vm419 = vcmask 7168
    %v420 = vsel %vm419, %v417, 0.0
    %v421 = vrot.slane %v420, 4
    %v422 = vadd.f32 %v420, %v421
    %v423 = vrot.slane %v422, 2
    %v424 = vadd.f32 %v422, %v423
    %v425 = vrot.slane %v424, 1
    %v426 = vadd.f32 %v424, %v425
    %v427 = vsel %vm419, %v418, 0.0
    %v428 = vrot.slane %v427, 4
    %v429 = vadd.f32 %v427, %v428
    %v430 = vrot.slane %v429, 2
    %v431 = vadd.f32 %v429, %v430
    %v432 = vrot.slane %v431, 1
    %v433 = vadd.f32 %v431, %v432
    %v434 = vsel %vm419, %v426, 0.0
    %v435 = vsel %vm419, %v433, 0.0
    %v436 = vadd.f32 %v434, %v435
    %v437 = vlaneseq
    %v438 = vshrl.u32 %v437, 7
    %vm439 = vcmp.eq.s32.totalorder %v438, 0
    %vm440 = vcmp.eq.s32.totalorder %v37, 0
    %vm441 = vmand %vm439, %vm440
    %v442 = vsel %vm441, %v175, 0.0
    %vm443 = vcmp.eq.s32.totalorder %v37, 1
    %vm444 = vmand %vm439, %vm443
    %v445 = vsel %vm444, %v194, 0.0
    %v446 = vadd.f32 %v442, %v445
    %vm447 = vcmp.eq.s32.totalorder %v37, 2
    %vm448 = vmand %vm439, %vm447
    %450 = vrot.lane.b32.xlu0 %v268, 120
    %v451 = vpop.permute.xlu0 %450
    %s452 = vtos %v451
    %v453 = vstv %s452
    %v455 = vsel %vm448, %v453, 0.0
    %v456 = vadd.f32 %v446, %v455
    %vm457 = vcmp.eq.s32.totalorder %v37, 3
    %vm458 = vmand %vm439, %vm457
    %v459 = vsel %vm458, %v310, 0.0
    %v460 = vadd.f32 %v456, %v459
    %vm461 = vcmp.eq.s32.totalorder %v37, 4
    %vm462 = vmand %vm439, %vm461
    %464 = vset.pattern.permute.xlu0 0
    %465 = vperm.xlu0 %464, %v436
    %v466 = vpop.permute.xlu0 %465
    %v468 = vsel %vm462, %v466, 0.0
    %v469 = vadd.f32 %v460, %v468
    %470 = vst [vmem:[#allocation2] sm:$0xff] %v469
    // Predicated region
    $region30: #{tpu_custom_call.1} parent=1 // pred_check
      _
    $region31: #{tpu_custom_call.1} parent=1 // pred_check_branch
      %472 = sbr.rel (0) target = $region33
    $region32: #{tpu_custom_call.1} parent=1 // pred_region
      %s474 = ssub.s32 128, 128
      %475 = vsyncadd [#allocation3], %s474
      %s477 = sshll.u32 [#allocation2], 4
      %s478 = int_to_ptr.vmem [resolvable:$true] %s477
      %480 = dma.vmem_to_hbm [thread:$0]  %s478, 128, %s7, [#allocation3]
    $region33: #{tpu_custom_call.1} parent=1 // pred_fallthru
      _
    // Predicated region
    $region34: #{tpu_custom_call.1} parent=1 // pred_check
      _
    $region35: #{tpu_custom_call.1} parent=1 // pred_check_branch
      %482 = sbr.rel (0) target = $region37
    $region36: #{tpu_custom_call.1} parent=1 // pred_region
      %483 = dma.done [#allocation3], 128
    $region37: #{tpu_custom_call.1} parent=1 // pred_fallthru
      _
    %484 = vsyncpa [#allocation3], 1

</llo_original>
